<compile_context>
chip_gen: v5e
topology: v5e:2x2
jax: 0.10.0
libtpu: 0.0.40
codegen_flags: <defaults>
</compile_context>

<pallas_src>
import jax
import jax.numpy as jnp
from jax import lax
from jax.experimental import pallas as pl
from jax.experimental.pallas import tpu as pltpu


def make_attention_kernel(heads: int, dim_head: int, bb: int, n: int, inner: int):
    """bb = batch elements fused per grid step, n = sequence length."""
    rows = bb * n

    def kernel(x_ref, wqkv_ref, wo_ref, bo_ref, o_ref):
        # x_ref:    (rows, D)            bf16   rows of `bb` batch elements
        # wqkv_ref: (D, 3*inner)         bf16   [q | k | v] columns, scale folded into q
        # wo_ref:   (heads, dim_head, D) bf16
        # bo_ref:   (1, D)               f32
        # o_ref:    (rows, D)            f32
        x = x_ref[...]                                         # (rows, D) bf16

        # --- one wide fused QKV projection: single MXU push, lane width 3*inner ---
        qkv = jnp.dot(x, wqkv_ref[...],
                      preferred_element_type=jnp.float32)      # (rows, 3*inner) f32

        acc = None                                             # register-held f32 accumulator
        for h in range(heads):                                 # small static unroll (heads only)
            base = h * dim_head
            q = qkv[:, base:base + dim_head]                   # scale already folded in
            k = qkv[:, inner + base:inner + base + dim_head]
            v = qkv[:, 2 * inner + base:2 * inner + base + dim_head]

            # Batch the softmax / PV step over bb via an einsum batch dim.
            # The reshapes only split/merge the leading (row) dim of f32 values
            # (n % 8 == 0), so no lane relayout is needed.
            q3 = q.reshape(bb, n, dim_head).astype(jnp.bfloat16)
            k3 = k.reshape(bb, n, dim_head).astype(jnp.bfloat16)
            v3 = v.reshape(bb, n, dim_head).astype(jnp.bfloat16)

            dots = jnp.einsum("bqd,bkd->bqk", q3, k3,
                              preferred_element_type=jnp.float32)      # (bb, n, n) f32

            # numerically-stable softmax (f32 on VPU; reciprocal on the EUP slot)
            m = jnp.max(dots, axis=-1, keepdims=True)
            e = jnp.exp(dots - m)
            s = jnp.sum(e, axis=-1, keepdims=True)
            p = (e * pl.reciprocal(s, approx=True)).astype(jnp.bfloat16)

            o_h = jnp.einsum("bqk,bkd->bqd", p, v3,
                             preferred_element_type=jnp.float32)       # (bb, n, dim_head)
            o2 = o_h.reshape(rows, dim_head).astype(jnp.bfloat16)

            # Fold "concat heads -> to_out Linear" into a sum over heads:
            # one (rows, dim_head) @ (dim_head, D) matmul per head, accumulated in
            # registers; single o_ref store at the end (no VMEM RMW traffic).
            contrib = jnp.dot(o2, wo_ref[h],
                              preferred_element_type=jnp.float32)      # (rows, D) f32
            acc = contrib if acc is None else acc + contrib

        o_ref[...] = (acc + bo_ref[...]).astype(o_ref.dtype)

    return kernel


def attention_forward(x, w_qkv, w_out, b_out, *, heads: int, dim_head: int):
    """x: (B, N, D) float32 -> (B, N, D) float32.

    w_qkv: (D, 3*inner)  (transposed torch to_qkv weight, column order [q | k | v])
    w_out: (inner, D)    (transposed torch to_out weight)
    b_out: (D,)
    """
    B, N, D = x.shape
    inner = heads * dim_head
    scale = dim_head ** (-0.5)
    assert w_qkv.shape == (D, 3 * inner)
    assert w_out.shape == (inner, D)
    assert N % 8 == 0, "sequence length must be a multiple of 8 (sublane tile)"
    # TODO(synk): pad + mask for N not a multiple of 8 (e.g. ViT N=197) and add a
    # Q-tiled online-softmax grid axis before scaling to real ViT sequence lengths.

    # Row-batching: fuse several batch elements per grid step (bigger M for every MXU
    # call, amortizes ~0.35us/step pipeline overhead), but keep >= 2 grid steps so the
    # "parallel" axis shards across v7x's two TensorCores.
    target_rows = 1024
    bb_cap = max(1, B // 2)
    bb = max(1, min(bb_cap, max(1, target_rows // N)))
    while B % bb:
        bb -= 1
    rows = bb * N
    grid = (B // bb,)

    # Host-side weight re-layout:
    #  * fused QKV weight (D, 3*inner) with the softmax scale folded into the q columns
    #  * per-head output-projection stack (heads, dim_head, D)
    #  * everything bf16 (halves weight DMA bytes); bias stays f32.
    w_fused = jnp.concatenate([w_qkv[:, :inner] * scale, w_qkv[:, inner:]],
                              axis=1).astype(jnp.bfloat16)             # (D, 3*inner)
    wo = w_out.reshape(heads, dim_head, D).astype(jnp.bfloat16)        # (heads, dh, D)
    bo = b_out.reshape(1, D).astype(jnp.float32)

    # Fold (B, N) into one row dimension; bf16 halves the input DMA bytes.
    x2 = x.reshape(B * N, D).astype(jnp.bfloat16)

    kernel = make_attention_kernel(heads, dim_head, bb, N, inner)

    # VMEM budget derived from the actual footprint (double-buffered x/out blocks +
    # weights + headroom), clamped to the ~48 MiB usable on v7x; never below the
    # 32 MiB that is known-safe on all generations.
    block_bytes = 2 * (rows * D * 2) + 2 * (rows * D * 4)      # 2x in (bf16) + 2x out (f32)
    weight_bytes = 2 * ((3 * inner * D + inner * D) * 2 + D * 4)
    vmem_limit_bytes = int(min(max(block_bytes + weight_bytes + (4 << 20), 32 << 20),
                               48 << 20))

    out = pl.pallas_call(
        kernel,
        out_shape=jax.ShapeDtypeStruct((B * N, D), jnp.float32),
        grid_spec=pltpu.PrefetchScalarGridSpec(
            num_scalar_prefetch=0,
            grid=grid,
            in_specs=[
                pl.BlockSpec((rows, D), lambda i: (i, 0)),
                pl.BlockSpec((D, 3 * inner), lambda i: (0, 0)),
                pl.BlockSpec((heads, dim_head, D), lambda i: (0, 0, 0)),
                pl.BlockSpec((1, D), lambda i: (0, 0)),
            ],
            out_specs=pl.BlockSpec((rows, D), lambda i: (i, 0)),
        ),
        compiler_params=pltpu.CompilerParams(
            dimension_semantics=("parallel",),
            vmem_limit_bytes=vmem_limit_bytes,
        ),
    )(x2, w_fused, wo, bo)

    return out.reshape(B, N, D)


def attention_reference(x, w_qkv, w_out, b_out, *, heads: int, dim_head: int):
    """Pure-JAX f32 reference mirroring the PyTorch forward (dropout = identity)."""
    B, N, D = x.shape
    inner = heads * dim_head
    scale = dim_head ** (-0.5)
    qkv = jnp.einsum("bnd,de->bne", x, w_qkv)
    q, k, v = jnp.split(qkv, 3, axis=-1)

    def split_heads(t):  # 'b n (h d) -> b h n d'
        return t.reshape(B, N, heads, dim_head).transpose(0, 2, 1, 3)

    q, k, v = map(split_heads, (q, k, v))
    dots = jnp.einsum("bhnd,bhmd->bhnm", q, k) * scale
    attn = jax.nn.softmax(dots, axis=-1)
    out = jnp.einsum("bhnm,bhmd->bhnd", attn, v)
    out = out.transpose(0, 2, 1, 3).reshape(B, N, inner)  # 'b h n d -> b n (h d)'
    return jnp.einsum("bni,id->bnd", out, w_out) + b_out


if __name__ == "__main__":
    # Small shapes consistent with the module: dim=32, heads=4, dim_head=8.
    B, N, D = 2, 8, 32
    heads, dim_head = 4, 8
    inner = heads * dim_head

    key = jax.random.PRNGKey(0)
    kx, k1, k2, k3 = jax.random.split(key, 4)

    x = jax.random.normal(kx, (B, N, D), dtype=jnp.float32)
    # Deterministic synthetic parameters (no checkpoint load).
    w_qkv = 0.02 * jax.random.normal(k1, (D, 3 * inner), dtype=jnp.float32)
    w_out = 0.02 * jax.random.normal(k2, (inner, D), dtype=jnp.float32)
    b_out = 0.01 * jax.random.normal(k3, (D,), dtype=jnp.float32)

    out = attention_forward(x, w_qkv, w_out, b_out, heads=heads, dim_head=dim_head)
    out = jax.block_until_ready(out)

    ref = attention_reference(x, w_qkv, w_out, b_out, heads=heads, dim_head=dim_head)
    assert out.shape == (B, N, D)
    # bf16 MXU operands + approximate reciprocal -> loosened tolerance vs. f32 reference.
    assert jnp.allclose(out, ref, atol=1e-2, rtol=1e-2), "mismatch vs reference"

    print("KERNEL_OK")
</pallas_src>

<mosaic_0001>
module attributes {stable_mosaic.version = 11 : i64} {
  func.func @kernel(%arg0: i32, %arg1: memref<8x32xbf16, #tpu.memory_space<vmem>>, %arg2: memref<32x96xbf16, #tpu.memory_space<vmem>>, %arg3: memref<4x8x32xbf16, #tpu.memory_space<vmem>>, %arg4: memref<1x32xf32, #tpu.memory_space<vmem>>, %arg5: memref<8x32xf32, #tpu.memory_space<vmem>>) attributes {dimension_semantics = [#tpu.dimension_semantics<parallel>], iteration_bounds = array<i64: 2>, scalar_prefetch = 0 : i64, scratch_operands = 0 : i64, tpu.core_type = #tpu.core_type<tc>, window_params = [{transform_indices = @transform_0, window_bounds = array<i64: 8, 32>}, {pipeline_mode = #tpu.pipeline_mode<synchronous>, transform_indices = @transform_1, window_bounds = array<i64: 32, 96>}, {pipeline_mode = #tpu.pipeline_mode<synchronous>, transform_indices = @transform_2, window_bounds = array<i64: 4, 8, 32>}, {pipeline_mode = #tpu.pipeline_mode<synchronous>, transform_indices = @transform_3, window_bounds = array<i64: 1, 32>}, {transform_indices = @transform_4, window_bounds = array<i64: 8, 32>}]} {
    %c0 = arith.constant 0 : index
    %c0_0 = arith.constant 0 : index
    %0 = vector.load %arg1[%c0, %c0_0] : memref<8x32xbf16, #tpu.memory_space<vmem>>, vector<8x32xbf16>
    %c0_1 = arith.constant 0 : index
    %c0_2 = arith.constant 0 : index
    %1 = vector.load %arg2[%c0_1, %c0_2] : memref<32x96xbf16, #tpu.memory_space<vmem>>, vector<32x96xbf16>
    %cst = arith.constant dense<0.000000e+00> : vector<8x96xf32>
    %2 = tpu.matmul %0, %1, %cst {dimension_numbers = #tpu.dot_dimension_numbers<[1], [0], [0], [1], [0, 0, 1, 1], [], []>} : vector<8x32xbf16>, vector<32x96xbf16>, vector<8x96xf32> -> vector<8x96xf32>
    %3 = vector.extract_strided_slice %2 {offsets = [0, 0], sizes = [8, 8], strides = [1, 1]} : vector<8x96xf32> to vector<8x8xf32>
    %4 = vector.extract_strided_slice %2 {offsets = [0, 32], sizes = [8, 8], strides = [1, 1]} : vector<8x96xf32> to vector<8x8xf32>
    %5 = vector.extract_strided_slice %2 {offsets = [0, 64], sizes = [8, 8], strides = [1, 1]} : vector<8x96xf32> to vector<8x8xf32>
    %6 = vector.shape_cast %3 : vector<8x8xf32> to vector<1x8x8xf32>
    %7 = arith.truncf %6 : vector<1x8x8xf32> to vector<1x8x8xbf16>
    %8 = vector.shape_cast %4 : vector<8x8xf32> to vector<1x8x8xf32>
    %9 = arith.truncf %8 : vector<1x8x8xf32> to vector<1x8x8xbf16>
    %10 = vector.shape_cast %5 : vector<8x8xf32> to vector<1x8x8xf32>
    %11 = arith.truncf %10 : vector<1x8x8xf32> to vector<1x8x8xbf16>
    "tpu.trace_start"() <{level = 10 : i32, message = "bqd,bkd->bqk"}> : () -> ()
    %cst_3 = arith.constant dense<0.000000e+00> : vector<1x8x8xf32>
    %12 = tpu.matmul %7, %9, %cst_3 {dimension_numbers = #tpu.dot_dimension_numbers<[2], [2], [1], [1], [0, 0, 0, 1, 1, 1], [0], [0]>} : vector<1x8x8xbf16>, vector<1x8x8xbf16>, vector<1x8x8xf32> -> vector<1x8x8xf32>
    "tpu.trace_stop"() : () -> ()
    %cst_4 = arith.constant dense<0xFF800000> : vector<1x8xf32>
    %13 = vector.multi_reduction <maximumf>, %12, %cst_4 [2] : vector<1x8x8xf32> to vector<1x8xf32>
    %14 = vector.shape_cast %13 : vector<1x8xf32> to vector<1x8x1xf32>
    %15 = vector.broadcast %14 : vector<1x8x1xf32> to vector<1x8x8xf32>
    %16 = arith.subf %12, %15 : vector<1x8x8xf32>
    %17 = math.exp %16 : vector<1x8x8xf32>
    %cst_5 = arith.constant dense<0.000000e+00> : vector<1x8xf32>
    %18 = vector.multi_reduction <add>, %17, %cst_5 [2] : vector<1x8x8xf32> to vector<1x8xf32>
    %19 = vector.shape_cast %18 : vector<1x8xf32> to vector<1x8x1xf32>
    %20 = tpu.reciprocal %19 {approx = true} : vector<1x8x1xf32> -> vector<1x8x1xf32>
    %21 = vector.broadcast %20 : vector<1x8x1xf32> to vector<1x8x8xf32>
    %22 = arith.mulf %17, %21 : vector<1x8x8xf32>
    %23 = arith.truncf %22 : vector<1x8x8xf32> to vector<1x8x8xbf16>
    "tpu.trace_start"() <{level = 10 : i32, message = "bqk,bkd->bqd"}> : () -> ()
    %cst_6 = arith.constant dense<0.000000e+00> : vector<1x8x8xf32>
    %24 = tpu.matmul %23, %11, %cst_6 {dimension_numbers = #tpu.dot_dimension_numbers<[2], [1], [1], [2], [0, 0, 0, 1, 1, 2], [0], [0]>} : vector<1x8x8xbf16>, vector<1x8x8xbf16>, vector<1x8x8xf32> -> vector<1x8x8xf32>
    "tpu.trace_stop"() : () -> ()
    %25 = vector.shape_cast %24 : vector<1x8x8xf32> to vector<8x8xf32>
    %26 = arith.truncf %25 : vector<8x8xf32> to vector<8x8xbf16>
    %c0_7 = arith.constant 0 : index
    %c0_8 = arith.constant 0 : index
    %c0_9 = arith.constant 0 : index
    %27 = vector.load %arg3[%c0_7, %c0_8, %c0_9] : memref<4x8x32xbf16, #tpu.memory_space<vmem>>, vector<1x8x32xbf16>
    %28 = vector.shape_cast %27 : vector<1x8x32xbf16> to vector<8x32xbf16>
    %cst_10 = arith.constant dense<0.000000e+00> : vector<8x32xf32>
    %29 = tpu.matmul %26, %28, %cst_10 {dimension_numbers = #tpu.dot_dimension_numbers<[1], [0], [0], [1], [0, 0, 1, 1], [], []>} : vector<8x8xbf16>, vector<8x32xbf16>, vector<8x32xf32> -> vector<8x32xf32>
    %30 = vector.extract_strided_slice %2 {offsets = [0, 8], sizes = [8, 8], strides = [1, 1]} : vector<8x96xf32> to vector<8x8xf32>
    %31 = vector.extract_strided_slice %2 {offsets = [0, 40], sizes = [8, 8], strides = [1, 1]} : vector<8x96xf32> to vector<8x8xf32>
    %32 = vector.extract_strided_slice %2 {offsets = [0, 72], sizes = [8, 8], strides = [1, 1]} : vector<8x96xf32> to vector<8x8xf32>
    %33 = vector.shape_cast %30 : vector<8x8xf32> to vector<1x8x8xf32>
    %34 = arith.truncf %33 : vector<1x8x8xf32> to vector<1x8x8xbf16>
    %35 = vector.shape_cast %31 : vector<8x8xf32> to vector<1x8x8xf32>
    %36 = arith.truncf %35 : vector<1x8x8xf32> to vector<1x8x8xbf16>
    %37 = vector.shape_cast %32 : vector<8x8xf32> to vector<1x8x8xf32>
    %38 = arith.truncf %37 : vector<1x8x8xf32> to vector<1x8x8xbf16>
    "tpu.trace_start"() <{level = 10 : i32, message = "bqd,bkd->bqk"}> : () -> ()
    %cst_11 = arith.constant dense<0.000000e+00> : vector<1x8x8xf32>
    %39 = tpu.matmul %34, %36, %cst_11 {dimension_numbers = #tpu.dot_dimension_numbers<[2], [2], [1], [1], [0, 0, 0, 1, 1, 1], [0], [0]>} : vector<1x8x8xbf16>, vector<1x8x8xbf16>, vector<1x8x8xf32> -> vector<1x8x8xf32>
    "tpu.trace_stop"() : () -> ()
    %cst_12 = arith.constant dense<0xFF800000> : vector<1x8xf32>
    %40 = vector.multi_reduction <maximumf>, %39, %cst_12 [2] : vector<1x8x8xf32> to vector<1x8xf32>
    %41 = vector.shape_cast %40 : vector<1x8xf32> to vector<1x8x1xf32>
    %42 = vector.broadcast %41 : vector<1x8x1xf32> to vector<1x8x8xf32>
    %43 = arith.subf %39, %42 : vector<1x8x8xf32>
    %44 = math.exp %43 : vector<1x8x8xf32>
    %cst_13 = arith.constant dense<0.000000e+00> : vector<1x8xf32>
    %45 = vector.multi_reduction <add>, %44, %cst_13 [2] : vector<1x8x8xf32> to vector<1x8xf32>
    %46 = vector.shape_cast %45 : vector<1x8xf32> to vector<1x8x1xf32>
    %47 = tpu.reciprocal %46 {approx = true} : vector<1x8x1xf32> -> vector<1x8x1xf32>
    %48 = vector.broadcast %47 : vector<1x8x1xf32> to vector<1x8x8xf32>
    %49 = arith.mulf %44, %48 : vector<1x8x8xf32>
    %50 = arith.truncf %49 : vector<1x8x8xf32> to vector<1x8x8xbf16>
    "tpu.trace_start"() <{level = 10 : i32, message = "bqk,bkd->bqd"}> : () -> ()
    %cst_14 = arith.constant dense<0.000000e+00> : vector<1x8x8xf32>
    %51 = tpu.matmul %50, %38, %cst_14 {dimension_numbers = #tpu.dot_dimension_numbers<[2], [1], [1], [2], [0, 0, 0, 1, 1, 2], [0], [0]>} : vector<1x8x8xbf16>, vector<1x8x8xbf16>, vector<1x8x8xf32> -> vector<1x8x8xf32>
    "tpu.trace_stop"() : () -> ()
    %52 = vector.shape_cast %51 : vector<1x8x8xf32> to vector<8x8xf32>
    %53 = arith.truncf %52 : vector<8x8xf32> to vector<8x8xbf16>
    %c1 = arith.constant 1 : index
    %c0_15 = arith.constant 0 : index
    %c0_16 = arith.constant 0 : index
    %54 = vector.load %arg3[%c1, %c0_15, %c0_16] : memref<4x8x32xbf16, #tpu.memory_space<vmem>>, vector<1x8x32xbf16>
    %55 = vector.shape_cast %54 : vector<1x8x32xbf16> to vector<8x32xbf16>
    %cst_17 = arith.constant dense<0.000000e+00> : vector<8x32xf32>
    %56 = tpu.matmul %53, %55, %cst_17 {dimension_numbers = #tpu.dot_dimension_numbers<[1], [0], [0], [1], [0, 0, 1, 1], [], []>} : vector<8x8xbf16>, vector<8x32xbf16>, vector<8x32xf32> -> vector<8x32xf32>
    %57 = arith.addf %29, %56 : vector<8x32xf32>
    %58 = vector.extract_strided_slice %2 {offsets = [0, 16], sizes = [8, 8], strides = [1, 1]} : vector<8x96xf32> to vector<8x8xf32>
    %59 = vector.extract_strided_slice %2 {offsets = [0, 48], sizes = [8, 8], strides = [1, 1]} : vector<8x96xf32> to vector<8x8xf32>
    %60 = vector.extract_strided_slice %2 {offsets = [0, 80], sizes = [8, 8], strides = [1, 1]} : vector<8x96xf32> to vector<8x8xf32>
    %61 = vector.shape_cast %58 : vector<8x8xf32> to vector<1x8x8xf32>
    %62 = arith.truncf %61 : vector<1x8x8xf32> to vector<1x8x8xbf16>
    %63 = vector.shape_cast %59 : vector<8x8xf32> to vector<1x8x8xf32>
    %64 = arith.truncf %63 : vector<1x8x8xf32> to vector<1x8x8xbf16>
    %65 = vector.shape_cast %60 : vector<8x8xf32> to vector<1x8x8xf32>
    %66 = arith.truncf %65 : vector<1x8x8xf32> to vector<1x8x8xbf16>
    "tpu.trace_start"() <{level = 10 : i32, message = "bqd,bkd->bqk"}> : () -> ()
    %cst_18 = arith.constant dense<0.000000e+00> : vector<1x8x8xf32>
    %67 = tpu.matmul %62, %64, %cst_18 {dimension_numbers = #tpu.dot_dimension_numbers<[2], [2], [1], [1], [0, 0, 0, 1, 1, 1], [0], [0]>} : vector<1x8x8xbf16>, vector<1x8x8xbf16>, vector<1x8x8xf32> -> vector<1x8x8xf32>
    "tpu.trace_stop"() : () -> ()
    %cst_19 = arith.constant dense<0xFF800000> : vector<1x8xf32>
    %68 = vector.multi_reduction <maximumf>, %67, %cst_19 [2] : vector<1x8x8xf32> to vector<1x8xf32>
    %69 = vector.shape_cast %68 : vector<1x8xf32> to vector<1x8x1xf32>
    %70 = vector.broadcast %69 : vector<1x8x1xf32> to vector<1x8x8xf32>
    %71 = arith.subf %67, %70 : vector<1x8x8xf32>
    %72 = math.exp %71 : vector<1x8x8xf32>
    %cst_20 = arith.constant dense<0.000000e+00> : vector<1x8xf32>
    %73 = vector.multi_reduction <add>, %72, %cst_20 [2] : vector<1x8x8xf32> to vector<1x8xf32>
    %74 = vector.shape_cast %73 : vector<1x8xf32> to vector<1x8x1xf32>
    %75 = tpu.reciprocal %74 {approx = true} : vector<1x8x1xf32> -> vector<1x8x1xf32>
    %76 = vector.broadcast %75 : vector<1x8x1xf32> to vector<1x8x8xf32>
    %77 = arith.mulf %72, %76 : vector<1x8x8xf32>
    %78 = arith.truncf %77 : vector<1x8x8xf32> to vector<1x8x8xbf16>
    "tpu.trace_start"() <{level = 10 : i32, message = "bqk,bkd->bqd"}> : () -> ()
    %cst_21 = arith.constant dense<0.000000e+00> : vector<1x8x8xf32>
    %79 = tpu.matmul %78, %66, %cst_21 {dimension_numbers = #tpu.dot_dimension_numbers<[2], [1], [1], [2], [0, 0, 0, 1, 1, 2], [0], [0]>} : vector<1x8x8xbf16>, vector<1x8x8xbf16>, vector<1x8x8xf32> -> vector<1x8x8xf32>
    "tpu.trace_stop"() : () -> ()
    %80 = vector.shape_cast %79 : vector<1x8x8xf32> to vector<8x8xf32>
    %81 = arith.truncf %80 : vector<8x8xf32> to vector<8x8xbf16>
    %c2 = arith.constant 2 : index
    %c0_22 = arith.constant 0 : index
    %c0_23 = arith.constant 0 : index
    %82 = vector.load %arg3[%c2, %c0_22, %c0_23] : memref<4x8x32xbf16, #tpu.memory_space<vmem>>, vector<1x8x32xbf16>
    %83 = vector.shape_cast %82 : vector<1x8x32xbf16> to vector<8x32xbf16>
    %cst_24 = arith.constant dense<0.000000e+00> : vector<8x32xf32>
    %84 = tpu.matmul %81, %83, %cst_24 {dimension_numbers = #tpu.dot_dimension_numbers<[1], [0], [0], [1], [0, 0, 1, 1], [], []>} : vector<8x8xbf16>, vector<8x32xbf16>, vector<8x32xf32> -> vector<8x32xf32>
    %85 = arith.addf %57, %84 : vector<8x32xf32>
    %86 = vector.extract_strided_slice %2 {offsets = [0, 24], sizes = [8, 8], strides = [1, 1]} : vector<8x96xf32> to vector<8x8xf32>
    %87 = vector.extract_strided_slice %2 {offsets = [0, 56], sizes = [8, 8], strides = [1, 1]} : vector<8x96xf32> to vector<8x8xf32>
    %88 = vector.extract_strided_slice %2 {offsets = [0, 88], sizes = [8, 8], strides = [1, 1]} : vector<8x96xf32> to vector<8x8xf32>
    %89 = vector.shape_cast %86 : vector<8x8xf32> to vector<1x8x8xf32>
    %90 = arith.truncf %89 : vector<1x8x8xf32> to vector<1x8x8xbf16>
    %91 = vector.shape_cast %87 : vector<8x8xf32> to vector<1x8x8xf32>
    %92 = arith.truncf %91 : vector<1x8x8xf32> to vector<1x8x8xbf16>
    %93 = vector.shape_cast %88 : vector<8x8xf32> to vector<1x8x8xf32>
    %94 = arith.truncf %93 : vector<1x8x8xf32> to vector<1x8x8xbf16>
    "tpu.trace_start"() <{level = 10 : i32, message = "bqd,bkd->bqk"}> : () -> ()
    %cst_25 = arith.constant dense<0.000000e+00> : vector<1x8x8xf32>
    %95 = tpu.matmul %90, %92, %cst_25 {dimension_numbers = #tpu.dot_dimension_numbers<[2], [2], [1], [1], [0, 0, 0, 1, 1, 1], [0], [0]>} : vector<1x8x8xbf16>, vector<1x8x8xbf16>, vector<1x8x8xf32> -> vector<1x8x8xf32>
    "tpu.trace_stop"() : () -> ()
    %cst_26 = arith.constant dense<0xFF800000> : vector<1x8xf32>
    %96 = vector.multi_reduction <maximumf>, %95, %cst_26 [2] : vector<1x8x8xf32> to vector<1x8xf32>
    %97 = vector.shape_cast %96 : vector<1x8xf32> to vector<1x8x1xf32>
    %98 = vector.broadcast %97 : vector<1x8x1xf32> to vector<1x8x8xf32>
    %99 = arith.subf %95, %98 : vector<1x8x8xf32>
    %100 = math.exp %99 : vector<1x8x8xf32>
    %cst_27 = arith.constant dense<0.000000e+00> : vector<1x8xf32>
    %101 = vector.multi_reduction <add>, %100, %cst_27 [2] : vector<1x8x8xf32> to vector<1x8xf32>
    %102 = vector.shape_cast %101 : vector<1x8xf32> to vector<1x8x1xf32>
    %103 = tpu.reciprocal %102 {approx = true} : vector<1x8x1xf32> -> vector<1x8x1xf32>
    %104 = vector.broadcast %103 : vector<1x8x1xf32> to vector<1x8x8xf32>
    %105 = arith.mulf %100, %104 : vector<1x8x8xf32>
    %106 = arith.truncf %105 : vector<1x8x8xf32> to vector<1x8x8xbf16>
    "tpu.trace_start"() <{level = 10 : i32, message = "bqk,bkd->bqd"}> : () -> ()
    %cst_28 = arith.constant dense<0.000000e+00> : vector<1x8x8xf32>
    %107 = tpu.matmul %106, %94, %cst_28 {dimension_numbers = #tpu.dot_dimension_numbers<[2], [1], [1], [2], [0, 0, 0, 1, 1, 2], [0], [0]>} : vector<1x8x8xbf16>, vector<1x8x8xbf16>, vector<1x8x8xf32> -> vector<1x8x8xf32>
    "tpu.trace_stop"() : () -> ()
    %108 = vector.shape_cast %107 : vector<1x8x8xf32> to vector<8x8xf32>
    %109 = arith.truncf %108 : vector<8x8xf32> to vector<8x8xbf16>
    %c3 = arith.constant 3 : index
    %c0_29 = arith.constant 0 : index
    %c0_30 = arith.constant 0 : index
    %110 = vector.load %arg3[%c3, %c0_29, %c0_30] : memref<4x8x32xbf16, #tpu.memory_space<vmem>>, vector<1x8x32xbf16>
    %111 = vector.shape_cast %110 : vector<1x8x32xbf16> to vector<8x32xbf16>
    %cst_31 = arith.constant dense<0.000000e+00> : vector<8x32xf32>
    %112 = tpu.matmul %109, %111, %cst_31 {dimension_numbers = #tpu.dot_dimension_numbers<[1], [0], [0], [1], [0, 0, 1, 1], [], []>} : vector<8x8xbf16>, vector<8x32xbf16>, vector<8x32xf32> -> vector<8x32xf32>
    %113 = arith.addf %85, %112 : vector<8x32xf32>
    %c0_32 = arith.constant 0 : index
    %c0_33 = arith.constant 0 : index
    %114 = vector.load %arg4[%c0_32, %c0_33] : memref<1x32xf32, #tpu.memory_space<vmem>>, vector<1x32xf32>
    %115 = vector.broadcast %114 : vector<1x32xf32> to vector<8x32xf32>
    %116 = arith.addf %113, %115 : vector<8x32xf32>
    %c0_34 = arith.constant 0 : index
    %c0_35 = arith.constant 0 : index
    %117 = vector.load %arg5[%c0_34, %c0_35] : memref<8x32xf32, #tpu.memory_space<vmem>>, vector<8x32xf32>
    tpu.vector_store %arg5[%c0_34, %c0_35], %116 {strides = array<i32>} : memref<8x32xf32, #tpu.memory_space<vmem>>, vector<8x32xf32>,
    return
  }
  func.func @transform_0(%arg0: i32) -> (i32, i32) {
    %c0_i32 = arith.constant 0 : i32
    %c0_i32_0 = arith.constant 0 : i32
    return %arg0, %c0_i32 : i32, i32
  }
  func.func @transform_1(%arg0: i32) -> (i32, i32) {
    %c0_i32 = arith.constant 0 : i32
    %c0_i32_0 = arith.constant 0 : i32
    %c0_i32_1 = arith.constant 0 : i32
    return %c0_i32, %c0_i32_0 : i32, i32
  }
  func.func @transform_2(%arg0: i32) -> (i32, i32, i32) {
    %c0_i32 = arith.constant 0 : i32
    %c0_i32_0 = arith.constant 0 : i32
    %c0_i32_1 = arith.constant 0 : i32
    %c0_i32_2 = arith.constant 0 : i32
    return %c0_i32, %c0_i32_0, %c0_i32_1 : i32, i32, i32
  }
  func.func @transform_3(%arg0: i32) -> (i32, i32) {
    %c0_i32 = arith.constant 0 : i32
    %c0_i32_0 = arith.constant 0 : i32
    %c0_i32_1 = arith.constant 0 : i32
    return %c0_i32, %c0_i32_0 : i32, i32
  }
  func.func @transform_4(%arg0: i32) -> (i32, i32) {
    %c0_i32 = arith.constant 0 : i32
    %c0_i32_0 = arith.constant 0 : i32
    return %arg0, %c0_i32 : i32, i32
  }
}

</mosaic_0001>

<llo_original>
// kernel: tpu_custom_call.1
$region0: #{tpu_custom_call.1}
  #allocation0 [shape = 'u32[]', space=smem, size = 0x4, offset = 0x4, fixed_abs, tag = 'smem constant byte address 0x4 - core index']
  #allocation1 [shape = 'u32[72,128]{1,0:T(1,128)}', space=vmem, size = 0x9000, scoped, tag = 'internal scratch']
  %s0 = inlined_call_operand.hbm [shape: bf16[16,32], index: 0, kind: input, shape index: {}]
  %s1 = inlined_call_operand.hbm [shape: bf16[32,96], index: 1, kind: input, shape index: {}]
  %s2 = inlined_call_operand.hbm [shape: bf16[4,8,32], index: 2, kind: input, shape index: {}]
  %s3 = inlined_call_operand.vmem [shape: f32[1,32], index: 3, kind: input, shape index: {}]
  %s4 = inlined_call_operand.hbm [shape: f32[16,32], index: 4, kind: output, shape index: {}]
  %s5 = sld [smem:[#allocation0]]
  $region61: #{tpu_custom_call.1} parent=0
    _
  %s7 = ssub.s32 1, %s5
  %s8 = scalar_select 0, %s7, %s5
  $region1: #{tpu_custom_call.1} parent=0
    #allocation2 [shape = 'u8[4096]{0}', space=vmem, size = 0x1000, scoped, tag = 'input window, operand 0']
    #allocation3 [shape = 's32[2]{0}', space=sflag, size = 0x8, scoped, tag = 'scoped memory for tpu_custom_call.1']
    #allocation4 [shape = 's32[2]{0}', space=sflag, size = 0x8, scoped, tag = 'scoped memory for tpu_custom_call.1']
    #allocation5 [shape = 'u8[8192]{0}', space=vmem, size = 0x2000, scoped, tag = 'input window, operand 1, single buffered']
    #allocation6 [shape = 's32[1]{0}', space=sflag, size = 0x4, scoped, tag = 'scoped memory for tpu_custom_call.1']
    #allocation7 [shape = 'u8[8192]{0}', space=vmem, size = 0x2000, scoped, tag = 'input window, operand 2, single buffered']
    #allocation8 [shape = 'u8[8192]{0}', space=vmem, size = 0x2000, scoped, tag = 'output window, operand 0']
    %9 = vsyncpa [#allocation3], 0
    %s10 = scalar_lea.sflag [#allocation3], 1
    %11 = vsyncpa %s10, 0
    %12 = vsyncpa [#allocation6], 0
    %13 = vsyncpa [#allocation4], 0
    %s14 = scalar_lea.sflag [#allocation4], 1
    %15 = vsyncpa %s14, 0
    loop: start=0, step=1, limit=4
    $region2: #{tpu_custom_call.1} parent=1 // loop_pre_header
      _
    $region3: #{tpu_custom_call.1} parent=1 // loop_header
      %s17 = sphi 0, %s21
      %p18 = scmp.ge.s32.totalorder %s17, 4
      %s27 = sphi 0, %s29
      %s30 = sphi 0, %s27
      %s31 = sphi 0, %s30
      %s47 = sphi 0, %s31
      %s51 = sphi 0, %s51
      %s53 = sphi 0, %s51
      %s54 = sphi 0, %s53
      %s68 = sphi 0, %s54
      %s72 = sphi 0, %s72
      %s74 = sphi 0, %s72
      %s75 = sphi 0, %s74
      %s89 = sphi 0, %s75
      %s93 = sphi 0, %s93
      %s95 = sphi 0, %s93
      %s96 = sphi 0, %s95
      %s110 = sphi 0, %s96
      %s116 = sphi 0, %s118
      %s119 = sphi 0, %s116
      %s120 = sphi 0, %s119
      %s136 = sphi 0, %s120
    $region4: #{tpu_custom_call.1} parent=1 // loop_header_branch
      %20 = sbr.rel (%p18) target = $region8
    $region5: #{tpu_custom_call.1} parent=1 // loop_body
      %s22 = ssub.s32 %s17, 1
      %s23 = ssub.s32 %s17, 2
      %s24 = sadd.s32 %s17, 1
      %s25 = ssub.s32 %s17, %s24
      %p26 = scmp.eq.s32.totalorder %s25, 0
      %s28 = sadd.s32 %s27, 1
      %s29 = scalar_select %p26, %s27, %s28
      %p32 = pneg %p26
      %p33 = scmp.eq.s32.totalorder %s17, 1
      %p34 = por %p32, %p33
      %p35 = scmp.ne.s32.totalorder %s27, %s30
      %p36 = scmp.eq.s32.totalorder %s17, 0
      %p37 = por %p35, %p36
      %p38 = scmp.ne.s32.totalorder %s27, %s30
      %p39 = scmp.eq.s32.totalorder %s22, 1
      %p40 = por %p38, %p39
      %p41 = scmp.ne.s32.totalorder %s30, %s31
      %p42 = scmp.eq.s32.totalorder %s22, 0
      %p43 = por %p41, %p42
      %p44 = scmp.ne.s32.totalorder %s30, %s31
      %p45 = scmp.eq.s32.totalorder %s23, 1
      %p46 = por %p44, %p45
      %p48 = scmp.ne.s32.totalorder %s31, %s47
      %p49 = scmp.eq.s32.totalorder %s23, 0
      %p50 = por %p48, %p49
      %s52 = sadd.s32 %s51, 1
      %p55 = scmp.eq.s32.totalorder %s17, 1
      %p56 = scmp.ne.s32.totalorder %s51, %s53
      %p57 = scmp.eq.s32.totalorder %s17, 0
      %p58 = por %p56, %p57
      %p59 = scmp.ne.s32.totalorder %s51, %s53
      %p60 = scmp.eq.s32.totalorder %s22, 1
      %p61 = por %p59, %p60
      %p62 = scmp.ne.s32.totalorder %s53, %s54
      %p63 = scmp.eq.s32.totalorder %s22, 0
      %p64 = por %p62, %p63
      %p65 = scmp.ne.s32.totalorder %s53, %s54
      %p66 = scmp.eq.s32.totalorder %s23, 1
      %p67 = por %p65, %p66
      %p69 = scmp.ne.s32.totalorder %s54, %s68
      %p70 = scmp.eq.s32.totalorder %s23, 0
      %p71 = por %p69, %p70
      %s73 = sadd.s32 %s72, 1
      %p76 = scmp.eq.s32.totalorder %s17, 1
      %p77 = scmp.ne.s32.totalorder %s72, %s74
      %p78 = scmp.eq.s32.totalorder %s17, 0
      %p79 = por %p77, %p78
      %p80 = scmp.ne.s32.totalorder %s72, %s74
      %p81 = scmp.eq.s32.totalorder %s22, 1
      %p82 = por %p80, %p81
      %p83 = scmp.ne.s32.totalorder %s74, %s75
      %p84 = scmp.eq.s32.totalorder %s22, 0
      %p85 = por %p83, %p84
      %p86 = scmp.ne.s32.totalorder %s74, %s75
      %p87 = scmp.eq.s32.totalorder %s23, 1
      %p88 = por %p86, %p87
      %p90 = scmp.ne.s32.totalorder %s75, %s89
      %p91 = scmp.eq.s32.totalorder %s23, 0
      %p92 = por %p90, %p91
      %s94 = sadd.s32 %s93, 1
      %p97 = scmp.eq.s32.totalorder %s17, 1
      %p98 = scmp.ne.s32.totalorder %s93, %s95
      %p99 = scmp.eq.s32.totalorder %s17, 0
      %p100 = por %p98, %p99
      %p101 = scmp.ne.s32.totalorder %s93, %s95
      %p102 = scmp.eq.s32.totalorder %s22, 1
      %p103 = por %p101, %p102
      %p104 = scmp.ne.s32.totalorder %s95, %s96
      %p105 = scmp.eq.s32.totalorder %s22, 0
      %p106 = por %p104, %p105
      %p107 = scmp.ne.s32.totalorder %s95, %s96
      %p108 = scmp.eq.s32.totalorder %s23, 1
      %p109 = por %p107, %p108
      %p111 = scmp.ne.s32.totalorder %s96, %s110
      %p112 = scmp.eq.s32.totalorder %s23, 0
      %p113 = por %p111, %p112
      %s114 = ssub.s32 %s17, %s24
      %p115 = scmp.eq.s32.totalorder %s114, 0
      %s117 = sadd.s32 %s116, 1
      %s118 = scalar_select %p115, %s116, %s117
      %p121 = pneg %p115
      %p122 = scmp.eq.s32.totalorder %s17, 1
      %p123 = por %p121, %p122
      %p124 = scmp.ne.s32.totalorder %s116, %s119
      %p125 = scmp.eq.s32.totalorder %s17, 0
      %p126 = por %p124, %p125
      %p127 = scmp.ne.s32.totalorder %s116, %s119
      %p128 = scmp.eq.s32.totalorder %s22, 1
      %p129 = por %p127, %p128
      %p130 = scmp.ne.s32.totalorder %s119, %s120
      %p131 = scmp.eq.s32.totalorder %s22, 0
      %p132 = por %p130, %p131
      %p133 = scmp.ne.s32.totalorder %s119, %s120
      %p134 = scmp.eq.s32.totalorder %s23, 1
      %p135 = por %p133, %p134
      %p137 = scmp.ne.s32.totalorder %s120, %s136
      %p138 = scmp.eq.s32.totalorder %s23, 0
      %p139 = por %p137, %p138
      %p140 = scmp.le.s32.totalorder 1, %s17
      %p141 = scmp.lt.s32.totalorder %s17, 3
      %p142 = pnand %p140, %p141
      %p143 = pneg %p142
      // Predicated region
      $region9: #{tpu_custom_call.1} parent=5 // pred_check
        _
      $region10: #{tpu_custom_call.1} parent=5 // pred_check_branch
        %145 = sbr.rel (%p142) target = $region12
      $region11: #{tpu_custom_call.1} parent=5 // pred_region
        %s146 = ssub.s32 %s17, 1
        // Predicated region
        $region13: #{tpu_custom_call.1} parent=11 // pred_check
          %p147 = pneg %p64
        $region14: #{tpu_custom_call.1} parent=11 // pred_check_branch
          %149 = sbr.rel (%p147) target = $region16
        $region15: #{tpu_custom_call.1} parent=11 // pred_region
          %151 = vsyncadd [#allocation6], 0
          %s152 = sshll.u32 %s1, 4
          %s153 = int_to_ptr.hbm [resolvable:$true] %s152
          %s154 = sshll.u32 [#allocation5], 4
          %s155 = int_to_ptr.vmem [resolvable:$true] %s154
          %160 = dma.hbm_to_vmem [thread:$0]  %s153, 256, %s155, [#allocation6], 64, 64, 4
        $region16: #{tpu_custom_call.1} parent=11 // pred_fallthru
          _
        // Predicated region
        $region17: #{tpu_custom_call.1} parent=11 // pred_check
          %p161 = pneg %p85
        $region18: #{tpu_custom_call.1} parent=11 // pred_check_branch
          %163 = sbr.rel (%p161) target = $region20
        $region19: #{tpu_custom_call.1} parent=11 // pred_region
          %165 = vsyncadd [#allocation6], 0
          %s166 = sshll.u32 %s2, 4
          %s167 = int_to_ptr.hbm [resolvable:$true] %s166
          %s168 = sshll.u32 [#allocation7], 4
          %s169 = int_to_ptr.vmem [resolvable:$true] %s168
          %174 = dma.hbm_to_vmem [thread:$0]  %s167, 256, %s169, [#allocation6], 64, 64, 4
        $region20: #{tpu_custom_call.1} parent=11 // pred_fallthru
          _
        // Predicated region
        $region21: #{tpu_custom_call.1} parent=11 // pred_check
          %p175 = pneg %p106
        $region22: #{tpu_custom_call.1} parent=11 // pred_check_branch
          %177 = sbr.rel (%p175) target = $region24
        $region23: #{tpu_custom_call.1} parent=11 // pred_region
          _
        $region24: #{tpu_custom_call.1} parent=11 // pred_fallthru
          _
      $region12: #{tpu_custom_call.1} parent=5 // pred_fallthru
        _
      %p178 = scmp.lt.s32.totalorder %s17, 2
      // Predicated region
      $region25: #{tpu_custom_call.1} parent=5 // pred_check
        %p179 = pneg %p178
      $region26: #{tpu_custom_call.1} parent=5 // pred_check_branch
        %181 = sbr.rel (%p179) target = $region28
      $region27: #{tpu_custom_call.1} parent=5 // pred_region
        // Predicated region
        $region29: #{tpu_custom_call.1} parent=27 // pred_check
          %p182 = pneg %p37
        $region30: #{tpu_custom_call.1} parent=27 // pred_check_branch
          %184 = sbr.rel (%p182) target = $region32
        $region31: #{tpu_custom_call.1} parent=27 // pred_region
          %s185 = sand.u32 %s27, 1
          %s186 = scalar_lea.sflag [#allocation3], %s185
          %s187 = sand.u32 %s27, 1
          %s188 = smul.addr %s187, 4
          %s189 = scalar_lea.vmem [#allocation2], %s188
          %191 = vsyncadd %s186, 0
          %s192 = smul.addr %s17, 4
          %s193 = scalar_lea.hbm %s0, %s192
          %s195 = sshll.u32 %s193, 4
          %s196 = int_to_ptr.hbm [resolvable:$true] %s195
          %s197 = sshll.u32 %s189, 4
          %s198 = int_to_ptr.vmem [resolvable:$true] %s197
          %200 = dma.hbm_to_vmem [thread:$0]  %s196, 64, %s198, %s186
        $region32: #{tpu_custom_call.1} parent=27 // pred_fallthru
          _
      $region28: #{tpu_custom_call.1} parent=5 // pred_fallthru
        _
      %p201 = scmp.le.s32.totalorder 1, %s17
      %p202 = scmp.lt.s32.totalorder %s17, 3
      %p203 = pnand %p201, %p202
      %p204 = pneg %p203
      // Predicated region
      $region33: #{tpu_custom_call.1} parent=5 // pred_check
        _
      $region34: #{tpu_custom_call.1} parent=5 // pred_check_branch
        %206 = sbr.rel (%p203) target = $region36
      $region35: #{tpu_custom_call.1} parent=5 // pred_region
        %s207 = ssub.s32 %s17, 1
        %s208 = sand.u32 %s30, 1
        %s209 = scalar_lea.sflag [#allocation3], %s208
        %s210 = sand.u32 %s30, 1
        %s211 = smul.addr %s210, 4
        %s212 = scalar_lea.vmem [#allocation2], %s211
        // Predicated region
        $region37: #{tpu_custom_call.1} parent=35 // pred_check
          %p213 = pneg %p43
        $region38: #{tpu_custom_call.1} parent=35 // pred_check_branch
          %215 = sbr.rel (%p213) target = $region40
        $region39: #{tpu_custom_call.1} parent=35 // pred_region
          %217 = dma.done %s209, 64
        $region40: #{tpu_custom_call.1} parent=35 // pred_fallthru
          _
        // Predicated region
        $region41: #{tpu_custom_call.1} parent=35 // pred_check
          %p218 = pneg %p64
        $region42: #{tpu_custom_call.1} parent=35 // pred_check_branch
          %220 = sbr.rel (%p218) target = $region44
        $region43: #{tpu_custom_call.1} parent=35 // pred_region
          %222 = dma.done [#allocation6], 256
        $region44: #{tpu_custom_call.1} parent=35 // pred_fallthru
          _
        // Predicated region
        $region45: #{tpu_custom_call.1} parent=35 // pred_check
          %p223 = pneg %p85
        $region46: #{tpu_custom_call.1} parent=35 // pred_check_branch
          %225 = sbr.rel (%p223) target = $region48
        $region47: #{tpu_custom_call.1} parent=35 // pred_region
          %227 = dma.done [#allocation6], 256
        $region48: #{tpu_custom_call.1} parent=35 // pred_fallthru
          _
        %s228 = sand.u32 %s30, 1
        %s229 = scalar_lea.sflag [#allocation3], %s228
        %s230 = sand.u32 %s30, 1
        %s231 = smul.addr %s230, 4
        %s232 = scalar_lea.vmem [#allocation2], %s231
        %p233 = pneg %p43
        %p234 = pneg %p40
        %p235 = pneg %p64
        %p236 = pneg %p61
        %p237 = pneg %p85
        %p238 = pneg %p82
        %p239 = pneg %p106
        %p240 = pneg %p103
        %p241 = pneg %p132
        %p242 = pneg %p129
        %s243 = sand.u32 %s119, 1
        %s244 = scalar_lea.sflag [#allocation4], %s243
        %s245 = sand.u32 %s119, 1
        %s246 = smul.addr %s245, 8
        %s247 = scalar_lea.vmem [#allocation8], %s246
        %v249 = vld [vmem:[%s212] sm:$0xf]
        %v250 = vld [vmem:[#allocation5] sm:$0xf]
        %v251 = vld [vmem:[#allocation5 + $0x4] sm:$0xf]
        %v252 = vld [vmem:[#allocation5 + $0x8] sm:$0xf]
        %v253 = vld [vmem:[#allocation5 + $0xc] sm:$0xf]
        %v258 = vunpack.c.l.b16 %v250
        %v259 = vunpack.c.l.b16 %v251
        %v260 = vunpack.c.l.b16 %v252
        %v261 = vunpack.c.l.b16 %v253
        %v262 = vpack.c.b16 %v259, %v258
        %v263 = vpack.c.b16 %v261, %v260
        %vm266 = vcmask 261120
        %v268 = vsel %vm266, %v249, 0
        %270 = vmatpush.bf16.msra.mxu0 0
        %271 = vmatpush.bf16.msra.mxu0 0
        %272 = vmatpush.bf16.msra.mxu0 0
        %273 = vmatpush.bf16.msra.mxu0 0
        %274 = vmatpush.bf16.msra.mxu0 0
        %275 = vmatpush.bf16.msra.mxu0 0
        %276 = vmatpush.bf16.msra.mxu0 %v263
        %277 = vmatpush.bf16.msra.mxu0 %v262
        %278 = vmatmul.bf16.gmra.mxu0 %v268
        %v279 = vpop.f32.mrf.mxu0
        %v280 = vadd.f32 0.0, %v279
        %v281 = vpop.f32.mrf.mxu0
        %282 = vdwg.mxu0
        %v283 = vpack.c.bf16 %v280, %v280
        %v285 = vunpack.c.l.b16 %v283
        %v286 = vpack.c.b16 %v285, %v285
        %287 = vrot.lane.b32.xlu0 %v286, 96
        %v288 = vpop.permute.xlu0 %287
        %vm289 = vcmask 64512
        %v291 = vsel %vm289, %v283, 0
        %v294 = vsel %vm289, %v288, 0
        %296 = vmatpush.bf16.xpose.msra.mxu0 0
        %297 = vmatpush.bf16.xpose.msra.mxu0 0
        %298 = vmatpush.bf16.xpose.msra.mxu0 0
        %299 = vmatpush.bf16.xpose.msra.mxu0 0
        %300 = vmatpush.bf16.xpose.msra.mxu0 0
        %301 = vmatpush.bf16.xpose.msra.mxu0 0
        %302 = vmatpush.bf16.xpose.msra.mxu0 0
        %303 = vmatpush.bf16.xpose.msra.mxu0 %v294
        %304 = vmatmul.bf16.gmra.mxu0 %v291
        %v305 = vpop.f32.mrf.mxu0
        %v306 = vadd.f32 0.0, %v305
        %v307 = vpop.f32.mrf.mxu0
        %308 = vdwg.mxu0
        %v309 = vsel %vm289, %v306, -inf
        %310 = vmax.xlane.f32.xlu0 %v309
        %v311 = vpop.xlane.xlu0 %310
        %v312 = vsub.f32 %v306, %v311
        %v313 = vmul.f32 %v312, 1.442695
        %v314 = vpow.pop %v313
        %v315 = vsel %vm289, %v314, 0.0
        %316 = vadd.xlane.f32.xlu0 %v315
        %v317 = vpop.xlane.xlu0 %316
        %v318 = vrcp.pop %v317
        %v319 = vmul.f32 %v314, %v318
        %v320 = vpack.c.bf16 %v319, %v319
        %321 = vrot.lane.b32.xlu0 %v286, 64
        %v322 = vpop.permute.xlu0 %321
        %v324 = vsel %vm289, %v320, 0
        %vm326 = vcmask 1043456
        %v328 = vsel %vm326, %v322, 0
        %330 = vmatpush.bf16.msra.mxu0 0
        %331 = vmatpush.bf16.msra.mxu0 0
        %332 = vmatpush.bf16.msra.mxu0 0
        %333 = vmatpush.bf16.msra.mxu0 0
        %334 = vmatpush.bf16.msra.mxu0 0
        %335 = vmatpush.bf16.msra.mxu0 0
        %336 = vmatpush.bf16.msra.mxu0 0
        %337 = vmatpush.bf16.msra.mxu0 %v328
        %338 = vmatmul.bf16.gmra.mxu0 %v324
        %v339 = vpop.f32.mrf.mxu0
        %v340 = vadd.f32 0.0, %v339
        %v341 = vpop.f32.mrf.mxu0
        %342 = vdwg.mxu0
        %v343 = vpack.c.bf16 %v340, %v340
        %v344 = vld [vmem:[#allocation7] sm:$0xf]
        %345 = vrot.lane.b32.xlu0 %v286, 120
        %v346 = vpop.permute.xlu0 %345
        %347 = vrot.lane.b32.xlu0 %v286, 88
        %v348 = vpop.permute.xlu0 %347
        %v350 = vsel %vm289, %v346, 0
        %v353 = vsel %vm289, %v348, 0
        %355 = vmatpush.bf16.xpose.msra.mxu0 0
        %356 = vmatpush.bf16.xpose.msra.mxu0 0
        %357 = vmatpush.bf16.xpose.msra.mxu0 0
        %358 = vmatpush.bf16.xpose.msra.mxu0 0
        %359 = vmatpush.bf16.xpose.msra.mxu0 0
        %360 = vmatpush.bf16.xpose.msra.mxu0 0
        %361 = vmatpush.bf16.xpose.msra.mxu0 0
        %362 = vmatpush.bf16.xpose.msra.mxu0 %v353
        %363 = vmatmul.bf16.gmra.mxu0 %v350
        %v364 = vpop.f32.mrf.mxu0
        %v365 = vadd.f32 0.0, %v364
        %v366 = vpop.f32.mrf.mxu0
        %367 = vdwg.mxu0
        %v368 = vsel %vm289, %v365, -inf
        %369 = vmax.xlane.f32.xlu0 %v368
        %v370 = vpop.xlane.xlu0 %369
        %v371 = vsub.f32 %v365, %v370
        %v372 = vmul.f32 %v371, 1.442695
        %v373 = vpow.pop %v372
        %v374 = vsel %vm289, %v373, 0.0
        %375 = vadd.xlane.f32.xlu0 %v374
        %v376 = vpop.xlane.xlu0 %375
        %v377 = vrcp.pop %v376
        %v378 = vmul.f32 %v373, %v377
        %v379 = vpack.c.bf16 %v378, %v378
        %380 = vrot.lane.b32.xlu0 %v286, 56
        %v381 = vpop.permute.xlu0 %380
        %v383 = vsel %vm289, %v379, 0
        %v386 = vsel %vm326, %v381, 0
        %388 = vmatpush.bf16.msra.mxu0 0
        %389 = vmatpush.bf16.msra.mxu0 0
        %390 = vmatpush.bf16.msra.mxu0 0
        %391 = vmatpush.bf16.msra.mxu0 0
        %392 = vmatpush.bf16.msra.mxu0 0
        %393 = vmatpush.bf16.msra.mxu0 0
        %394 = vmatpush.bf16.msra.mxu0 0
        %395 = vmatpush.bf16.msra.mxu0 %v386
        %396 = vmatmul.bf16.gmra.mxu0 %v383
        %v397 = vpop.f32.mrf.mxu0
        %v398 = vadd.f32 0.0, %v397
        %v399 = vpop.f32.mrf.mxu0
        %400 = vdwg.mxu0
        %v401 = vpack.c.bf16 %v398, %v398
        %s402 = scalar_lea.vmem [#allocation7], 4
        %v403 = vld [vmem:[%s402] sm:$0xf]
        %v405 = vsel %vm289, %v401, 0
        %v408 = vsel %vm326, %v403, 0
        %410 = vmatpush.bf16.msra.mxu0 0
        %411 = vmatpush.bf16.msra.mxu0 0
        %412 = vmatpush.bf16.msra.mxu0 0
        %413 = vmatpush.bf16.msra.mxu0 0
        %414 = vmatpush.bf16.msra.mxu0 0
        %415 = vmatpush.bf16.msra.mxu0 0
        %416 = vmatpush.bf16.msra.mxu0 0
        %417 = vmatpush.bf16.msra.mxu0 %v408
        %418 = vmatmul.bf16.gmra.mxu0 %v405
        %v419 = vpop.f32.mrf.mxu0
        %v420 = vadd.f32 0.0, %v419
        %v421 = vpop.f32.mrf.mxu0
        %422 = vdwg.mxu0
        %v424 = vsel %vm289, %v343, 0
        %v427 = vsel %vm326, %v344, 0
        %429 = vmatpush.bf16.msra.mxu0 0
        %430 = vmatpush.bf16.msra.mxu0 0
        %431 = vmatpush.bf16.msra.mxu0 0
        %432 = vmatpush.bf16.msra.mxu0 0
        %433 = vmatpush.bf16.msra.mxu0 0
        %434 = vmatpush.bf16.msra.mxu0 0
        %435 = vmatpush.bf16.msra.mxu0 0
        %436 = vmatpush.bf16.msra.mxu0 %v427
        %437 = vmatmul.bf16.gmra.mxu0 %v424
        %v438 = vpop.f32.mrf.mxu0
        %v439 = vadd.f32 %v420, %v438
        %v440 = vpop.f32.mrf.mxu0
        %441 = vdwg.mxu0
        %442 = vrot.lane.b32.xlu0 %v286, 112
        %v443 = vpop.permute.xlu0 %442
        %444 = vrot.lane.b32.xlu0 %v286, 80
        %v445 = vpop.permute.xlu0 %444
        %v447 = vsel %vm289, %v443, 0
        %v450 = vsel %vm289, %v445, 0
        %452 = vmatpush.bf16.xpose.msra.mxu0 0
        %453 = vmatpush.bf16.xpose.msra.mxu0 0
        %454 = vmatpush.bf16.xpose.msra.mxu0 0
        %455 = vmatpush.bf16.xpose.msra.mxu0 0
        %456 = vmatpush.bf16.xpose.msra.mxu0 0
        %457 = vmatpush.bf16.xpose.msra.mxu0 0
        %458 = vmatpush.bf16.xpose.msra.mxu0 0
        %459 = vmatpush.bf16.xpose.msra.mxu0 %v450
        %460 = vmatmul.bf16.gmra.mxu0 %v447
        %v461 = vpop.f32.mrf.mxu0
        %v462 = vadd.f32 0.0, %v461
        %v463 = vpop.f32.mrf.mxu0
        %464 = vdwg.mxu0
        %v465 = vsel %vm289, %v462, -inf
        %466 = vmax.xlane.f32.xlu0 %v465
        %v467 = vpop.xlane.xlu0 %466
        %v468 = vsub.f32 %v462, %v467
        %v469 = vmul.f32 %v468, 1.442695
        %v470 = vpow.pop %v469
        %v471 = vsel %vm289, %v470, 0.0
        %472 = vadd.xlane.f32.xlu0 %v471
        %v473 = vpop.xlane.xlu0 %472
        %v474 = vrcp.pop %v473
        %v475 = vmul.f32 %v470, %v474
        %v476 = vpack.c.bf16 %v475, %v475
        %477 = vrot.lane.b32.xlu0 %v286, 48
        %v478 = vpop.permute.xlu0 %477
        %v480 = vsel %vm289, %v476, 0
        %v483 = vsel %vm326, %v478, 0
        %485 = vmatpush.bf16.msra.mxu0 0
        %486 = vmatpush.bf16.msra.mxu0 0
        %487 = vmatpush.bf16.msra.mxu0 0
        %488 = vmatpush.bf16.msra.mxu0 0
        %489 = vmatpush.bf16.msra.mxu0 0
        %490 = vmatpush.bf16.msra.mxu0 0
        %491 = vmatpush.bf16.msra.mxu0 0
        %492 = vmatpush.bf16.msra.mxu0 %v483
        %493 = vmatmul.bf16.gmra.mxu0 %v480
        %v494 = vpop.f32.mrf.mxu0
        %v495 = vadd.f32 0.0, %v494
        %v496 = vpop.f32.mrf.mxu0
        %497 = vdwg.mxu0
        %v498 = vpack.c.bf16 %v495, %v495
        %s499 = scalar_lea.vmem [#allocation7], 8
        %v500 = vld [vmem:[%s499] sm:$0xf]
        %v502 = vsel %vm289, %v498, 0
        %v505 = vsel %vm326, %v500, 0
        %507 = vmatpush.bf16.msra.mxu0 0
        %508 = vmatpush.bf16.msra.mxu0 0
        %509 = vmatpush.bf16.msra.mxu0 0
        %510 = vmatpush.bf16.msra.mxu0 0
        %511 = vmatpush.bf16.msra.mxu0 0
        %512 = vmatpush.bf16.msra.mxu0 0
        %513 = vmatpush.bf16.msra.mxu0 0
        %514 = vmatpush.bf16.msra.mxu0 %v505
        %515 = vmatmul.bf16.gmra.mxu0 %v502
        %v516 = vpop.f32.mrf.mxu0
        %v517 = vadd.f32 0.0, %v516
        %v518 = vpop.f32.mrf.mxu0
        %519 = vdwg.mxu0
        %v520 = vadd.f32 %v439, %v517
        %521 = vrot.lane.b32.xlu0 %v286, 104
        %v522 = vpop.permute.xlu0 %521
        %523 = vrot.lane.b32.xlu0 %v286, 72
        %v524 = vpop.permute.xlu0 %523
        %v526 = vsel %vm289, %v522, 0
        %v529 = vsel %vm289, %v524, 0
        %531 = vmatpush.bf16.xpose.msra.mxu0 0
        %532 = vmatpush.bf16.xpose.msra.mxu0 0
        %533 = vmatpush.bf16.xpose.msra.mxu0 0
        %534 = vmatpush.bf16.xpose.msra.mxu0 0
        %535 = vmatpush.bf16.xpose.msra.mxu0 0
        %536 = vmatpush.bf16.xpose.msra.mxu0 0
        %537 = vmatpush.bf16.xpose.msra.mxu0 0
        %538 = vmatpush.bf16.xpose.msra.mxu0 %v529
        %539 = vmatmul.bf16.gmra.mxu0 %v526
        %v540 = vpop.f32.mrf.mxu0
        %v541 = vadd.f32 0.0, %v540
        %v542 = vpop.f32.mrf.mxu0
        %543 = vdwg.mxu0
        %v544 = vsel %vm289, %v541, -inf
        %545 = vmax.xlane.f32.xlu0 %v544
        %v546 = vpop.xlane.xlu0 %545
        %v547 = vsub.f32 %v541, %v546
        %v548 = vmul.f32 %v547, 1.442695
        %v549 = vpow.pop %v548
        %v550 = vsel %vm289, %v549, 0.0
        %551 = vadd.xlane.f32.xlu0 %v550
        %v552 = vpop.xlane.xlu0 %551
        %v553 = vrcp.pop %v552
        %v554 = vmul.f32 %v549, %v553
        %v555 = vpack.c.bf16 %v554, %v554
        %556 = vrot.lane.b32.xlu0 %v286, 40
        %v557 = vpop.permute.xlu0 %556
        %v559 = vsel %vm289, %v555, 0
        %v562 = vsel %vm326, %v557, 0
        %564 = vmatpush.bf16.msra.mxu0 0
        %565 = vmatpush.bf16.msra.mxu0 0
        %566 = vmatpush.bf16.msra.mxu0 0
        %567 = vmatpush.bf16.msra.mxu0 0
        %568 = vmatpush.bf16.msra.mxu0 0
        %569 = vmatpush.bf16.msra.mxu0 0
        %570 = vmatpush.bf16.msra.mxu0 0
        %571 = vmatpush.bf16.msra.mxu0 %v562
        %572 = vmatmul.bf16.gmra.mxu0 %v559
        %v573 = vpop.f32.mrf.mxu0
        %v574 = vadd.f32 0.0, %v573
        %v575 = vpop.f32.mrf.mxu0
        %576 = vdwg.mxu0
        %v577 = vpack.c.bf16 %v574, %v574
        %s578 = scalar_lea.vmem [#allocation7], 12
        %v579 = vld [vmem:[%s578] sm:$0xf]
        %v581 = vsel %vm289, %v577, 0
        %v584 = vsel %vm326, %v579, 0
        %586 = vmatpush.bf16.msra.mxu0 0
        %587 = vmatpush.bf16.msra.mxu0 0
        %588 = vmatpush.bf16.msra.mxu0 0
        %589 = vmatpush.bf16.msra.mxu0 0
        %590 = vmatpush.bf16.msra.mxu0 0
        %591 = vmatpush.bf16.msra.mxu0 0
        %592 = vmatpush.bf16.msra.mxu0 0
        %593 = vmatpush.bf16.msra.mxu0 %v584
        %594 = vmatmul.bf16.gmra.mxu0 %v581
        %v595 = vpop.f32.mrf.mxu0
        %v596 = vadd.f32 0.0, %v595
        %v597 = vpop.f32.mrf.mxu0
        %598 = vdwg.mxu0
        %v599 = vadd.f32 %v520, %v596
        %v600 = vld [vmem:[%s3] sm:$0x1]
        %v602 = vperm.slane %v600, 0
        %v604 = vadd.f32 %v599, %v602
        %605 = vst.msk [vmem:[%s247] sm:$0xff] %vm266, %v604
        %s606 = sand.u32 %s119, 1
        %s607 = scalar_lea.sflag [#allocation4], %s606
        %s608 = sand.u32 %s119, 1
        %s609 = smul.addr %s608, 8
        %s610 = scalar_lea.vmem [#allocation8], %s609
        // Predicated region
        $region49: #{tpu_custom_call.1} parent=35 // pred_check
          %p611 = pneg %p129
        $region50: #{tpu_custom_call.1} parent=35 // pred_check_branch
          %613 = sbr.rel (%p611) target = $region52
        $region51: #{tpu_custom_call.1} parent=35 // pred_region
          %615 = vsyncadd %s607, 0
          %s616 = smul.addr %s22, 8
          %s617 = scalar_lea.hbm %s4, %s616
          %s619 = sshll.u32 %s610, 4
          %s620 = int_to_ptr.vmem [resolvable:$true] %s619
          %s621 = sshll.u32 %s617, 4
          %s622 = int_to_ptr.hbm [resolvable:$true] %s621
          %624 = dma.vmem_to_hbm [thread:$0]  %s620, 128, %s622, %s607
        $region52: #{tpu_custom_call.1} parent=35 // pred_fallthru
          _
      $region36: #{tpu_custom_call.1} parent=5 // pred_fallthru
        _
      %p625 = scmp.le.s32.totalorder 2, %s17
      // Predicated region
      $region53: #{tpu_custom_call.1} parent=5 // pred_check
        %p626 = pneg %p625
      $region54: #{tpu_custom_call.1} parent=5 // pred_check_branch
        %628 = sbr.rel (%p626) target = $region56
      $region55: #{tpu_custom_call.1} parent=5 // pred_region
        %s629 = ssub.s32 %s17, 2
        // Predicated region
        $region57: #{tpu_custom_call.1} parent=55 // pred_check
          %p630 = pneg %p135
        $region58: #{tpu_custom_call.1} parent=55 // pred_check_branch
          %632 = sbr.rel (%p630) target = $region60
        $region59: #{tpu_custom_call.1} parent=55 // pred_region
          %s633 = sand.u32 %s120, 1
          %s634 = scalar_lea.sflag [#allocation4], %s633
          %s635 = sand.u32 %s120, 1
          %s636 = smul.addr %s635, 8
          %s637 = scalar_lea.vmem [#allocation8], %s636
          %639 = dma.done %s634, 128
        $region60: #{tpu_custom_call.1} parent=55 // pred_fallthru
          _
      $region56: #{tpu_custom_call.1} parent=5 // pred_fallthru
        _
    $region6: #{tpu_custom_call.1} parent=1 // loop_footer
      %s21 = sadd.s32 1, %s17
    $region7: #{tpu_custom_call.1} parent=1 // loop_footer_branch
      %16 = sbr.rel target = $region3
    $region8: #{tpu_custom_call.1} parent=1 // loop_exit
      _
    %640 = vsyncpa [#allocation3], 1
    %s641 = scalar_lea.sflag [#allocation3], 1
    %642 = vsyncpa %s641, 1
    %643 = vsyncpa [#allocation6], 1
    %644 = vsyncpa [#allocation4], 1
    %s645 = scalar_lea.sflag [#allocation4], 1
    %646 = vsyncpa %s645, 1

</llo_original>
